<compile_context>
chip_gen: v7x
topology: tpu7x:2x2x1
jax: 0.10.0
libtpu: 0.0.40
codegen_flags: <defaults>
</compile_context>

<pallas_src>
import jax
import jax.numpy as jnp
from jax.experimental import pallas as pl
from jax.experimental.pallas import tpu as pltpu


# ----------------------------- kernel ---------------------------------------


def align_kernel(dp_ref, y_ref, ms_ref, mt_ref,          # inputs
                 err_ref, nok_ref, npred_ref,             # outputs (per-batch)
                 err_acc, nok_acc, npred_acc):            # VMEM scratch
    i = pl.program_id(1)
    j = pl.program_id(2)
    n_i = pl.num_programs(1)
    n_j = pl.num_programs(2)

    # Zero the per-batch accumulators at the first inner step of this batch
    # element (scratch state never carries across the batch axis, so the
    # batch grid axis can be "parallel" / megacore-sharded).
    @pl.when(jnp.logical_and(i == 0, j == 0))
    def _():
        err_acc[...] = jnp.zeros_like(err_acc)
        nok_acc[...] = jnp.zeros_like(nok_acc)
        npred_acc[...] = jnp.zeros_like(npred_acc)

    dp = dp_ref[0].astype(jnp.float32)        # (TS, TT)
    yv = y_ref[0].astype(jnp.float32)         # (TS, TT)
    ms = ms_ref[0]                            # (TS, 1) f32
    mt = mt_ref[0]                            # (1, TT) f32

    cond = jnp.logical_or(dp > 0.0, yv < 0.0)
    mask = jnp.where(cond, ms * mt, 0.0)      # (TS, TT); exactly 0/1 for 0/1 masks
    prod = dp * yv

    # Same formula as the PyTorch reference (log(1 + exp(x))) — kept for exact
    # semantic parity; overflows to +inf for prod >~ 88 just like the reference.
    err_acc[...] += jnp.log(1.0 + jnp.exp(prod)) * mask

    pred = mask > 0.0
    nok_acc[...] += jnp.logical_and(pred, prod < 0.0).astype(jnp.int32)
    npred_acc[...] += pred.astype(jnp.int32)

    # Single final reduction + lane-dense store per batch element.
    @pl.when(jnp.logical_and(i == n_i - 1, j == n_j - 1))
    def _():
        err_ref[...] = jnp.zeros_like(err_ref) + jnp.sum(err_acc[...])
        nok_ref[...] = jnp.zeros_like(nok_ref) + jnp.sum(nok_acc[...])
        npred_ref[...] = jnp.zeros_like(npred_ref) + jnp.sum(npred_acc[...])


# ----------------------------- wrapper ---------------------------------------


def _round_up(x, m):
    return ((x + m - 1) // m) * m


def _pick_tile(dim, align, max_tile):
    """Pick (tile, padded_dim): either the full extent (if small enough) or a
    tile that is a multiple of `align`, minimizing padding (prefer bigger)."""
    if dim <= max_tile:
        return dim, dim                      # single full-extent block, no pad
    best_tile, best_pad = align, _round_up(dim, align)
    t = max_tile
    while t >= align:
        pad = _round_up(dim, t)
        if pad < best_pad or (pad == best_pad and t > best_tile):
            best_tile, best_pad = t, pad
        t -= align
    return best_tile, best_pad


def align(DP_st, y, mask_s, mask_t):
    """Pallas implementation of Align.forward.

    Args:
      DP_st: (B, S, T) float (f32 or bf16)
      y:     (B, S, T) float (f32 or bf16)
      mask_s: (B, S) 0/1 mask
      mask_t: (B, T) 0/1 mask
    Returns:
      (batch_error: f32 scalar, nok: i32 scalar, npred: i32 scalar)
    """
    assert DP_st.shape == y.shape
    assert DP_st.ndim == 3
    assert mask_s.ndim == 2 and mask_t.ndim == 2
    B, S, T = DP_st.shape
    assert mask_s.shape == (B, S) and mask_t.shape == (B, T)

    # Tile sizes: per-input f32 block <= 256*512*4 B = 0.5 MiB.
    TS, S_pad = _pick_tile(S, 8, 256)
    TT, T_pad = _pick_tile(T, 128, 512)

    def pad3(x, s_pad, t_pad):
        ps, pt = s_pad - x.shape[1], t_pad - x.shape[2]
        if ps or pt:
            x = jnp.pad(x, ((0, 0), (0, ps), (0, pt)))
        return x

    # Keep DP/y in their HBM dtype (bf16 supported); zero padding is safe
    # because the padded mask entries are zero.
    dp = pad3(DP_st, S_pad, T_pad)
    yv = pad3(y, S_pad, T_pad)
    ms = pad3(mask_s.astype(jnp.float32)[:, :, None], S_pad, 1)
    mt = pad3(mask_t.astype(jnp.float32)[:, None, :], 1, T_pad)

    grid = (B, S_pad // TS, T_pad // TT)

    out_shapes = (
        jax.ShapeDtypeStruct((B, 8, 128), jnp.float32),  # per-batch error
        jax.ShapeDtypeStruct((B, 8, 128), jnp.int32),    # per-batch nok
        jax.ShapeDtypeStruct((B, 8, 128), jnp.int32),    # per-batch npred
    )

    grid_spec = pltpu.PrefetchScalarGridSpec(
        num_scalar_prefetch=0,
        grid=grid,
        in_specs=[
            pl.BlockSpec((1, TS, TT), lambda b, i, j: (b, i, j)),
            pl.BlockSpec((1, TS, TT), lambda b, i, j: (b, i, j)),
            pl.BlockSpec((1, TS, 1), lambda b, i, j: (b, i, 0)),
            pl.BlockSpec((1, 1, TT), lambda b, i, j: (b, 0, j)),
        ],
        out_specs=[
            pl.BlockSpec((1, 8, 128), lambda b, i, j: (b, 0, 0)),
            pl.BlockSpec((1, 8, 128), lambda b, i, j: (b, 0, 0)),
            pl.BlockSpec((1, 8, 128), lambda b, i, j: (b, 0, 0)),
        ],
        scratch_shapes=[
            pltpu.VMEM((TS, TT), jnp.float32),   # error accumulator
            pltpu.VMEM((TS, TT), jnp.int32),     # nok accumulator
            pltpu.VMEM((TS, TT), jnp.int32),     # npred accumulator
        ],
    )

    err_p, nok_p, npred_p = pl.pallas_call(
        align_kernel,
        out_shape=out_shapes,
        grid_spec=grid_spec,
        compiler_params=pltpu.CompilerParams(
            # Batch axis is parallel (v7x megacore); S/T tiles are a reduction.
            dimension_semantics=("parallel", "arbitrary", "arbitrary")),
    )(dp, yv, ms, mt)

    # Tiny cross-batch reduction of the per-batch partials in plain JAX.
    batch_error = jnp.sum(err_p[:, 0, 0])
    nok = jnp.sum(nok_p[:, 0, 0])
    npred = jnp.sum(npred_p[:, 0, 0])
    return batch_error, nok, npred


def align_ref(DP_st, y, mask_s, mask_t):
    """Pure-JAX reference of the PyTorch forward for verification."""
    mask = (jnp.logical_or(DP_st > 0.0, y < 0.0).astype(jnp.float32)
            * mask_s[:, :, None] * mask_t[:, None, :])
    error = jnp.log(1.0 + jnp.exp(DP_st * y))
    batch_error = jnp.sum(error * mask)
    nok = jnp.sum((DP_st * y * mask < 0.0).astype(jnp.int32))
    npred = jnp.sum((mask == 1.0).astype(jnp.int32))
    return batch_error, nok, npred


if __name__ == "__main__":
    # Align is a parameterless criterion — only deterministic example inputs.
    key = jax.random.PRNGKey(0)
    k1, k2, k3, k4 = jax.random.split(key, 4)

    B, S, T = 2, 8, 16
    DP_st = jax.random.normal(k1, (B, S, T), dtype=jnp.float32)
    y = jnp.where(jax.random.bernoulli(k2, 0.5, (B, S, T)), 1.0, -1.0).astype(jnp.float32)
    mask_s = (jax.random.uniform(k3, (B, S)) < 0.8).astype(jnp.float32)
    mask_t = (jax.random.uniform(k4, (B, T)) < 0.8).astype(jnp.float32)

    batch_error, nok, npred = align(DP_st, y, mask_s, mask_t)
    jax.block_until_ready((batch_error, nok, npred))

    # Cross-check against the pure-JAX reference.
    ref_err, ref_nok, ref_npred = align_ref(DP_st, y, mask_s, mask_t)
    assert jnp.allclose(batch_error, ref_err, rtol=1e-5, atol=1e-5), (batch_error, ref_err)
    assert int(nok) == int(ref_nok), (nok, ref_nok)
    assert int(npred) == int(ref_npred), (npred, ref_npred)

    print("KERNEL_OK")
</pallas_src>

<mosaic_0001>
module attributes {stable_mosaic.version = 11 : i64} {
  func.func @align_kernel(%arg0: i32, %arg1: i32, %arg2: i32, %arg3: memref<1x8x16xf32, #tpu.memory_space<vmem>>, %arg4: memref<1x8x16xf32, #tpu.memory_space<vmem>>, %arg5: memref<1x8x1xf32, #tpu.memory_space<vmem>>, %arg6: memref<1x1x16xf32, #tpu.memory_space<vmem>>, %arg7: memref<1x8x128xf32, #tpu.memory_space<vmem>>, %arg8: memref<1x8x128xi32, #tpu.memory_space<vmem>>, %arg9: memref<1x8x128xi32, #tpu.memory_space<vmem>>, %arg10: memref<8x16xf32, #tpu.memory_space<vmem>>, %arg11: memref<8x16xi32, #tpu.memory_space<vmem>>, %arg12: memref<8x16xi32, #tpu.memory_space<vmem>>) attributes {dimension_semantics = [#tpu.dimension_semantics<parallel>, #tpu.dimension_semantics<arbitrary>, #tpu.dimension_semantics<arbitrary>], iteration_bounds = array<i64: 2, 1, 1>, scalar_prefetch = 0 : i64, scratch_operands = 3 : i64, tpu.core_type = #tpu.core_type<tc>, window_params = [{transform_indices = @transform_0, window_bounds = array<i64: 1, 8, 16>}, {transform_indices = @transform_1, window_bounds = array<i64: 1, 8, 16>}, {transform_indices = @transform_2, window_bounds = array<i64: 1, 8, 1>}, {transform_indices = @transform_3, window_bounds = array<i64: 1, 1, 16>}, {transform_indices = @transform_4, window_bounds = array<i64: 1, 8, 128>}, {transform_indices = @transform_5, window_bounds = array<i64: 1, 8, 128>}, {transform_indices = @transform_6, window_bounds = array<i64: 1, 8, 128>}]} {
    %c0_i32 = arith.constant 0 : i32
    %0 = arith.cmpi eq, %arg1, %c0_i32 : i32
    %c0_i32_0 = arith.constant 0 : i32
    %1 = arith.cmpi eq, %arg2, %c0_i32_0 : i32
    %2 = arith.andi %0, %1 : i1
    %3 = arith.extui %2 : i1 to i32
    %c0_i32_1 = arith.constant 0 : i32
    %4 = arith.cmpi ne, %3, %c0_i32_1 : i32
    scf.if %4 {
      %cst_33 = arith.constant 0.000000e+00 : f32
      %50 = vector.broadcast %cst_33 : f32 to vector<8x16xf32>
      %c0_34 = arith.constant 0 : index
      %c0_35 = arith.constant 0 : index
      %51 = vector.load %arg10[%c0_34, %c0_35] : memref<8x16xf32, #tpu.memory_space<vmem>>, vector<8x16xf32>
      tpu.vector_store %arg10[%c0_34, %c0_35], %50 {strides = array<i32>} : memref<8x16xf32, #tpu.memory_space<vmem>>, vector<8x16xf32>,
      %c0_i32_36 = arith.constant 0 : i32
      %52 = vector.broadcast %c0_i32_36 : i32 to vector<8x16xi32>
      %c0_37 = arith.constant 0 : index
      %c0_38 = arith.constant 0 : index
      %53 = vector.load %arg11[%c0_37, %c0_38] : memref<8x16xi32, #tpu.memory_space<vmem>>, vector<8x16xi32>
      tpu.vector_store %arg11[%c0_37, %c0_38], %52 {strides = array<i32>} : memref<8x16xi32, #tpu.memory_space<vmem>>, vector<8x16xi32>,
      %c0_i32_39 = arith.constant 0 : i32
      %54 = vector.broadcast %c0_i32_39 : i32 to vector<8x16xi32>
      %c0_40 = arith.constant 0 : index
      %c0_41 = arith.constant 0 : index
      %55 = vector.load %arg12[%c0_40, %c0_41] : memref<8x16xi32, #tpu.memory_space<vmem>>, vector<8x16xi32>
      tpu.vector_store %arg12[%c0_40, %c0_41], %54 {strides = array<i32>} : memref<8x16xi32, #tpu.memory_space<vmem>>, vector<8x16xi32>,
    } else {
    }
    %c0 = arith.constant 0 : index
    %c0_2 = arith.constant 0 : index
    %c0_3 = arith.constant 0 : index
    %5 = vector.load %arg3[%c0, %c0_2, %c0_3] : memref<1x8x16xf32, #tpu.memory_space<vmem>>, vector<1x8x16xf32>
    %6 = vector.shape_cast %5 : vector<1x8x16xf32> to vector<8x16xf32>
    %c0_4 = arith.constant 0 : index
    %c0_5 = arith.constant 0 : index
    %c0_6 = arith.constant 0 : index
    %7 = vector.load %arg4[%c0_4, %c0_5, %c0_6] : memref<1x8x16xf32, #tpu.memory_space<vmem>>, vector<1x8x16xf32>
    %8 = vector.shape_cast %7 : vector<1x8x16xf32> to vector<8x16xf32>
    %c0_7 = arith.constant 0 : index
    %c0_8 = arith.constant 0 : index
    %c0_9 = arith.constant 0 : index
    %9 = vector.load %arg5[%c0_7, %c0_8, %c0_9] : memref<1x8x1xf32, #tpu.memory_space<vmem>>, vector<1x8x1xf32>
    %10 = vector.shape_cast %9 : vector<1x8x1xf32> to vector<8x1xf32>
    %c0_10 = arith.constant 0 : index
    %c0_11 = arith.constant 0 : index
    %c0_12 = arith.constant 0 : index
    %11 = vector.load %arg6[%c0_10, %c0_11, %c0_12] : memref<1x1x16xf32, #tpu.memory_space<vmem>>, vector<1x1x16xf32>
    %12 = vector.shape_cast %11 : vector<1x1x16xf32> to vector<1x16xf32>
    %cst = arith.constant 0.000000e+00 : f32
    %13 = vector.broadcast %cst : f32 to vector<8x16xf32>
    %14 = arith.cmpf ogt, %6, %13 : vector<8x16xf32>
    %cst_13 = arith.constant 0.000000e+00 : f32
    %15 = vector.broadcast %cst_13 : f32 to vector<8x16xf32>
    %16 = arith.cmpf olt, %8, %15 : vector<8x16xf32>
    %17 = arith.ori %14, %16 : vector<8x16xi1>
    %18 = vector.broadcast %10 : vector<8x1xf32> to vector<8x16xf32>
    %19 = vector.broadcast %12 : vector<1x16xf32> to vector<8x16xf32>
    %20 = arith.mulf %18, %19 : vector<8x16xf32>
    %cst_14 = arith.constant 0.000000e+00 : f32
    %21 = vector.broadcast %cst_14 : f32 to vector<8x16xf32>
    %22 = arith.select %17, %20, %21 : vector<8x16xi1>, vector<8x16xf32>
    %23 = arith.mulf %6, %8 : vector<8x16xf32>
    %c0_15 = arith.constant 0 : index
    %c0_16 = arith.constant 0 : index
    %24 = vector.load %arg10[%c0_15, %c0_16] : memref<8x16xf32, #tpu.memory_space<vmem>>, vector<8x16xf32>
    %25 = math.exp %23 : vector<8x16xf32>
    %cst_17 = arith.constant 1.000000e+00 : f32
    %26 = vector.broadcast %cst_17 : f32 to vector<8x16xf32>
    %27 = arith.addf %26, %25 : vector<8x16xf32>
    %28 = math.log %27 : vector<8x16xf32>
    %29 = arith.mulf %28, %22 : vector<8x16xf32>
    %30 = arith.addf %24, %29 : vector<8x16xf32>
    %c0_18 = arith.constant 0 : index
    %c0_19 = arith.constant 0 : index
    %31 = vector.load %arg10[%c0_18, %c0_19] : memref<8x16xf32, #tpu.memory_space<vmem>>, vector<8x16xf32>
    tpu.vector_store %arg10[%c0_18, %c0_19], %30 {strides = array<i32>} : memref<8x16xf32, #tpu.memory_space<vmem>>, vector<8x16xf32>,
    %cst_20 = arith.constant 0.000000e+00 : f32
    %32 = vector.broadcast %cst_20 : f32 to vector<8x16xf32>
    %33 = arith.cmpf ogt, %22, %32 : vector<8x16xf32>
    %c0_21 = arith.constant 0 : index
    %c0_22 = arith.constant 0 : index
    %34 = vector.load %arg11[%c0_21, %c0_22] : memref<8x16xi32, #tpu.memory_space<vmem>>, vector<8x16xi32>
    %cst_23 = arith.constant 0.000000e+00 : f32
    %35 = vector.broadcast %cst_23 : f32 to vector<8x16xf32>
    %36 = arith.cmpf olt, %23, %35 : vector<8x16xf32>
    %37 = arith.andi %33, %36 : vector<8x16xi1>
    %38 = arith.extui %37 : vector<8x16xi1> to vector<8x16xi32>
    %39 = arith.addi %34, %38 : vector<8x16xi32>
    %c0_24 = arith.constant 0 : index
    %c0_25 = arith.constant 0 : index
    %40 = vector.load %arg11[%c0_24, %c0_25] : memref<8x16xi32, #tpu.memory_space<vmem>>, vector<8x16xi32>
    tpu.vector_store %arg11[%c0_24, %c0_25], %39 {strides = array<i32>} : memref<8x16xi32, #tpu.memory_space<vmem>>, vector<8x16xi32>,
    %c0_26 = arith.constant 0 : index
    %c0_27 = arith.constant 0 : index
    %41 = vector.load %arg12[%c0_26, %c0_27] : memref<8x16xi32, #tpu.memory_space<vmem>>, vector<8x16xi32>
    %42 = arith.extui %33 : vector<8x16xi1> to vector<8x16xi32>
    %43 = arith.addi %41, %42 : vector<8x16xi32>
    %c0_28 = arith.constant 0 : index
    %c0_29 = arith.constant 0 : index
    %44 = vector.load %arg12[%c0_28, %c0_29] : memref<8x16xi32, #tpu.memory_space<vmem>>, vector<8x16xi32>
    tpu.vector_store %arg12[%c0_28, %c0_29], %43 {strides = array<i32>} : memref<8x16xi32, #tpu.memory_space<vmem>>, vector<8x16xi32>,
    %c0_i32_30 = arith.constant 0 : i32
    %45 = arith.cmpi eq, %arg1, %c0_i32_30 : i32
    %c0_i32_31 = arith.constant 0 : i32
    %46 = arith.cmpi eq, %arg2, %c0_i32_31 : i32
    %47 = arith.andi %45, %46 : i1
    %48 = arith.extui %47 : i1 to i32
    %c0_i32_32 = arith.constant 0 : i32
    %49 = arith.cmpi ne, %48, %c0_i32_32 : i32
    scf.if %49 {
      %cst_33 = arith.constant 0.000000e+00 : f32
      %50 = vector.broadcast %cst_33 : f32 to vector<1x8x128xf32>
      %c0_34 = arith.constant 0 : index
      %c0_35 = arith.constant 0 : index
      %51 = vector.load %arg10[%c0_34, %c0_35] : memref<8x16xf32, #tpu.memory_space<vmem>>, vector<8x16xf32>
      %52 = vector.shape_cast %51 : vector<8x16xf32> to vector<1x8x16xf32>
      %cst_36 = arith.constant dense<0.000000e+00> : vector<1xf32>
      %53 = vector.multi_reduction <add>, %52, %cst_36 [1, 2] : vector<1x8x16xf32> to vector<1xf32>
      %54 = vector.shape_cast %53 : vector<1xf32> to vector<1x1x1xf32>
      %55 = vector.extract %54[0, 0, 0] : f32 from vector<1x1x1xf32>
      %56 = vector.broadcast %55 : f32 to vector<1x8x128xf32>
      %57 = arith.addf %50, %56 : vector<1x8x128xf32>
      %c0_37 = arith.constant 0 : index
      %c0_38 = arith.constant 0 : index
      %c0_39 = arith.constant 0 : index
      %58 = vector.load %arg7[%c0_37, %c0_38, %c0_39] : memref<1x8x128xf32, #tpu.memory_space<vmem>>, vector<1x8x128xf32>
      tpu.vector_store %arg7[%c0_37, %c0_38, %c0_39], %57 {strides = array<i32>} : memref<1x8x128xf32, #tpu.memory_space<vmem>>, vector<1x8x128xf32>,
      %c0_i32_40 = arith.constant 0 : i32
      %59 = vector.broadcast %c0_i32_40 : i32 to vector<1x8x128xi32>
      %c0_41 = arith.constant 0 : index
      %c0_42 = arith.constant 0 : index
      %60 = vector.load %arg11[%c0_41, %c0_42] : memref<8x16xi32, #tpu.memory_space<vmem>>, vector<8x16xi32>
      %61 = vector.shape_cast %60 : vector<8x16xi32> to vector<1x8x16xi32>
      %cst_43 = arith.constant dense<0> : vector<1xi32>
      %62 = vector.multi_reduction <add>, %61, %cst_43 [1, 2] : vector<1x8x16xi32> to vector<1xi32>
      %63 = vector.shape_cast %62 : vector<1xi32> to vector<1x1x1xi32>
      %64 = vector.extract %63[0, 0, 0] : i32 from vector<1x1x1xi32>
      %65 = vector.broadcast %64 : i32 to vector<1x8x128xi32>
      %66 = arith.addi %59, %65 : vector<1x8x128xi32>
      %c0_44 = arith.constant 0 : index
      %c0_45 = arith.constant 0 : index
      %c0_46 = arith.constant 0 : index
      %67 = vector.load %arg8[%c0_44, %c0_45, %c0_46] : memref<1x8x128xi32, #tpu.memory_space<vmem>>, vector<1x8x128xi32>
      tpu.vector_store %arg8[%c0_44, %c0_45, %c0_46], %66 {strides = array<i32>} : memref<1x8x128xi32, #tpu.memory_space<vmem>>, vector<1x8x128xi32>,
      %c0_i32_47 = arith.constant 0 : i32
      %68 = vector.broadcast %c0_i32_47 : i32 to vector<1x8x128xi32>
      %c0_48 = arith.constant 0 : index
      %c0_49 = arith.constant 0 : index
      %69 = vector.load %arg12[%c0_48, %c0_49] : memref<8x16xi32, #tpu.memory_space<vmem>>, vector<8x16xi32>
      %70 = vector.shape_cast %69 : vector<8x16xi32> to vector<1x8x16xi32>
      %cst_50 = arith.constant dense<0> : vector<1xi32>
      %71 = vector.multi_reduction <add>, %70, %cst_50 [1, 2] : vector<1x8x16xi32> to vector<1xi32>
      %72 = vector.shape_cast %71 : vector<1xi32> to vector<1x1x1xi32>
      %73 = vector.extract %72[0, 0, 0] : i32 from vector<1x1x1xi32>
      %74 = vector.broadcast %73 : i32 to vector<1x8x128xi32>
      %75 = arith.addi %68, %74 : vector<1x8x128xi32>
      %c0_51 = arith.constant 0 : index
      %c0_52 = arith.constant 0 : index
      %c0_53 = arith.constant 0 : index
      %76 = vector.load %arg9[%c0_51, %c0_52, %c0_53] : memref<1x8x128xi32, #tpu.memory_space<vmem>>, vector<1x8x128xi32>
      tpu.vector_store %arg9[%c0_51, %c0_52, %c0_53], %75 {strides = array<i32>} : memref<1x8x128xi32, #tpu.memory_space<vmem>>, vector<1x8x128xi32>,
    } else {
    }
    return
  }
  func.func @transform_0(%arg0: i32, %arg1: i32, %arg2: i32) -> (i32, i32, i32) {
    %c0_i32 = arith.constant 0 : i32
    return %arg0, %arg1, %arg2 : i32, i32, i32
  }
  func.func @transform_1(%arg0: i32, %arg1: i32, %arg2: i32) -> (i32, i32, i32) {
    %c0_i32 = arith.constant 0 : i32
    return %arg0, %arg1, %arg2 : i32, i32, i32
  }
  func.func @transform_2(%arg0: i32, %arg1: i32, %arg2: i32) -> (i32, i32, i32) {
    %c0_i32 = arith.constant 0 : i32
    %c0_i32_0 = arith.constant 0 : i32
    return %arg0, %arg1, %c0_i32 : i32, i32, i32
  }
  func.func @transform_3(%arg0: i32, %arg1: i32, %arg2: i32) -> (i32, i32, i32) {
    %c0_i32 = arith.constant 0 : i32
    %c0_i32_0 = arith.constant 0 : i32
    return %arg0, %c0_i32, %arg2 : i32, i32, i32
  }
  func.func @transform_4(%arg0: i32, %arg1: i32, %arg2: i32) -> (i32, i32, i32) {
    %c0_i32 = arith.constant 0 : i32
    %c0_i32_0 = arith.constant 0 : i32
    %c0_i32_1 = arith.constant 0 : i32
    return %arg0, %c0_i32, %c0_i32_0 : i32, i32, i32
  }
  func.func @transform_5(%arg0: i32, %arg1: i32, %arg2: i32) -> (i32, i32, i32) {
    %c0_i32 = arith.constant 0 : i32
    %c0_i32_0 = arith.constant 0 : i32
    %c0_i32_1 = arith.constant 0 : i32
    return %arg0, %c0_i32, %c0_i32_0 : i32, i32, i32
  }
  func.func @transform_6(%arg0: i32, %arg1: i32, %arg2: i32) -> (i32, i32, i32) {
    %c0_i32 = arith.constant 0 : i32
    %c0_i32_0 = arith.constant 0 : i32
    %c0_i32_1 = arith.constant 0 : i32
    return %arg0, %c0_i32, %c0_i32_0 : i32, i32, i32
  }
}

</mosaic_0001>

<llo_original>
// kernel: tpu_custom_call.1
$region0: #{tpu_custom_call.1}
  #allocation0 [shape = 'u32[]', space=smem, size = 0x4, offset = 0x4, fixed_abs, tag = 'smem constant byte address 0x4 - core index']
  #allocation1 [shape = 'u32[144,128]{1,0:T(1,128)}', space=vmem, size = 0x12000, scoped, tag = 'internal scratch']
  #allocation2 [shape = 'f32[8,16]{1,0:T(8,128)}', space=vmem, size = 0x1000, scoped, tag = 'scratch operand']
  #allocation3 [shape = 's32[8,16]{1,0:T(8,128)}', space=vmem, size = 0x1000, scoped, tag = 'scratch operand']
  #allocation4 [shape = 's32[8,16]{1,0:T(8,128)}', space=vmem, size = 0x1000, scoped, tag = 'scratch operand']
  %s0 = inlined_call_operand.vmem [shape: f32[2,8,16], index: 0, kind: input, shape index: {}]
  %s1 = inlined_call_operand.hbm [shape: f32[2,8,16], index: 1, kind: input, shape index: {}]
  %s2 = inlined_call_operand.vmem [shape: f32[2,8,1], index: 2, kind: input, shape index: {}]
  %s3 = inlined_call_operand.vmem [shape: f32[2,1,16], index: 3, kind: input, shape index: {}]
  %s4 = inlined_call_operand.hbm [shape: f32[2,8,128], index: 4, kind: output, shape index: {0}]
  %s5 = inlined_call_operand.hbm [shape: s32[2,8,128], index: 5, kind: output, shape index: {1}]
  %s6 = inlined_call_operand.hbm [shape: s32[2,8,128], index: 6, kind: output, shape index: {2}]
  %7 = xla_tuple %s4, %s5, %s6
  %s8 = sld [smem:[#allocation0]]
  $region77: #{tpu_custom_call.1} parent=0
    _
  %s10 = ssub.s32 1, %s8
  %s11 = scalar_select 0, %s10, %s8
  $region1: #{tpu_custom_call.1} parent=0
    #allocation5 [shape = 'u8[8192]{0}', space=vmem, size = 0x2000, scoped, tag = 'input window, operand 1']
    #allocation6 [shape = 's32[2]{0}', space=sflag, size = 0x8, scoped, tag = 'scoped memory for tpu_custom_call.1']
    #allocation7 [shape = 's32[2]{0}', space=sflag, size = 0x8, scoped, tag = 'scoped memory for tpu_custom_call.1']
    #allocation8 [shape = 'u8[8192]{0}', space=vmem, size = 0x2000, scoped, tag = 'output window, operand 0']
    #allocation9 [shape = 'u8[8192]{0}', space=vmem, size = 0x2000, scoped, tag = 'output window, operand 1']
    #allocation10 [shape = 's32[2]{0}', space=sflag, size = 0x8, scoped, tag = 'scoped memory for tpu_custom_call.1']
    #allocation11 [shape = 'u8[8192]{0}', space=vmem, size = 0x2000, scoped, tag = 'output window, operand 2']
    %12 = vsyncpa [#allocation6], 0
    %s13 = scalar_lea.sflag [#allocation6], 1
    %14 = vsyncpa %s13, 0
    %15 = vsyncpa [#allocation7], 0
    %s16 = scalar_lea.sflag [#allocation7], 1
    %17 = vsyncpa %s16, 0
    %18 = vsyncpa [#allocation10], 0
    %s19 = scalar_lea.sflag [#allocation10], 1
    %20 = vsyncpa %s19, 0
    loop: start=0, step=1, limit=4
    $region2: #{tpu_custom_call.1} parent=1 // loop_pre_header
      _
    $region3: #{tpu_custom_call.1} parent=1 // loop_header
      %s22 = sphi 0, %s26
      %p23 = scmp.ge.s32.totalorder %s22, 4
      %s29 = sphi 0, %s48
      %s30 = sphi 0, %s44
      %s31 = sphi 0, %s40
      %s32 = sphi 0, %s29
      %s33 = sphi 0, %s30
      %s34 = sphi 0, %s31
      %s35 = sphi 0, %s32
      %s36 = sphi 0, %s33
      %s37 = sphi 0, %s34
      %s55 = sphi 0, %s57
      %s58 = sphi 0, %s55
      %s59 = sphi 0, %s58
      %s75 = sphi 0, %s59
      %s85 = sphi 0, %s87
      %s88 = sphi 0, %s85
      %s89 = sphi 0, %s88
      %s105 = sphi 0, %s89
      %s113 = sphi 0, %s115
      %s116 = sphi 0, %s113
      %s117 = sphi 0, %s116
      %s133 = sphi 0, %s117
      %s141 = sphi 0, %s143
      %s144 = sphi 0, %s141
      %s145 = sphi 0, %s144
      %s161 = sphi 0, %s145
      %s167 = sphi 0, %s169
      %s170 = sphi 0, %s167
      %s171 = sphi 0, %s170
      %s187 = sphi 0, %s171
      %s193 = sphi 0, %s195
      %s196 = sphi 0, %s193
      %s197 = sphi 0, %s196
      %s213 = sphi 0, %s197
      %s219 = sphi 0, %s221
      %s222 = sphi 0, %s219
      %s223 = sphi 0, %s222
      %s239 = sphi 0, %s223
    $region4: #{tpu_custom_call.1} parent=1 // loop_header_branch
      %25 = sbr.rel (%p23) target = $region8
    $region5: #{tpu_custom_call.1} parent=1 // loop_body
      %s27 = ssub.s32 %s22, 1
      %s28 = ssub.s32 %s22, 2
      %s38 = sadd.s32 1, %s31
      %p39 = scmp.ge.s32.totalorder %s38, 1
      %s40 = scalar_select %p39, 0, %s38
      %s41 = sadd.s32 1, %s30
      %s42 = scalar_select %p39, %s41, %s30
      %p43 = scmp.ge.s32.totalorder %s42, 1
      %s44 = scalar_select %p43, 0, %s42
      %s45 = sadd.s32 1, %s29
      %s46 = scalar_select %p43, %s45, %s29
      %p47 = scmp.ge.s32.totalorder %s46, 2
      %s48 = scalar_select %p47, 0, %s46
      %s49 = ssub.s32 %s29, %s48
      %s50 = ssub.s32 %s30, %s44
      %s51 = sor.u32 %s49, %s50
      %s52 = ssub.s32 %s31, %s40
      %s53 = sor.u32 %s51, %s52
      %p54 = scmp.eq.s32.totalorder %s53, 0
      %s56 = sadd.s32 %s55, 1
      %s57 = scalar_select %p54, %s55, %s56
      %p60 = pneg %p54
      %p61 = scmp.eq.s32.totalorder %s22, 1
      %p62 = por %p60, %p61
      %p63 = scmp.ne.s32.totalorder %s55, %s58
      %p64 = scmp.eq.s32.totalorder %s22, 0
      %p65 = por %p63, %p64
      %p66 = scmp.ne.s32.totalorder %s55, %s58
      %p67 = scmp.eq.s32.totalorder %s27, 1
      %p68 = por %p66, %p67
      %p69 = scmp.ne.s32.totalorder %s58, %s59
      %p70 = scmp.eq.s32.totalorder %s27, 0
      %p71 = por %p69, %p70
      %p72 = scmp.ne.s32.totalorder %s58, %s59
      %p73 = scmp.eq.s32.totalorder %s28, 1
      %p74 = por %p72, %p73
      %p76 = scmp.ne.s32.totalorder %s59, %s75
      %p77 = scmp.eq.s32.totalorder %s28, 0
      %p78 = por %p76, %p77
      %s79 = ssub.s32 %s29, %s48
      %s80 = ssub.s32 %s30, %s44
      %s81 = sor.u32 %s79, %s80
      %s82 = ssub.s32 %s31, %s40
      %s83 = sor.u32 %s81, %s82
      %p84 = scmp.eq.s32.totalorder %s83, 0
      %s86 = sadd.s32 %s85, 1
      %s87 = scalar_select %p84, %s85, %s86
      %p90 = pneg %p84
      %p91 = scmp.eq.s32.totalorder %s22, 1
      %p92 = por %p90, %p91
      %p93 = scmp.ne.s32.totalorder %s85, %s88
      %p94 = scmp.eq.s32.totalorder %s22, 0
      %p95 = por %p93, %p94
      %p96 = scmp.ne.s32.totalorder %s85, %s88
      %p97 = scmp.eq.s32.totalorder %s27, 1
      %p98 = por %p96, %p97
      %p99 = scmp.ne.s32.totalorder %s88, %s89
      %p100 = scmp.eq.s32.totalorder %s27, 0
      %p101 = por %p99, %p100
      %p102 = scmp.ne.s32.totalorder %s88, %s89
      %p103 = scmp.eq.s32.totalorder %s28, 1
      %p104 = por %p102, %p103
      %p106 = scmp.ne.s32.totalorder %s89, %s105
      %p107 = scmp.eq.s32.totalorder %s28, 0
      %p108 = por %p106, %p107
      %s109 = ssub.s32 %s29, %s48
      %s110 = ssub.s32 %s30, %s44
      %s111 = sor.u32 %s109, %s110
      %p112 = scmp.eq.s32.totalorder %s111, 0
      %s114 = sadd.s32 %s113, 1
      %s115 = scalar_select %p112, %s113, %s114
      %p118 = pneg %p112
      %p119 = scmp.eq.s32.totalorder %s22, 1
      %p120 = por %p118, %p119
      %p121 = scmp.ne.s32.totalorder %s113, %s116
      %p122 = scmp.eq.s32.totalorder %s22, 0
      %p123 = por %p121, %p122
      %p124 = scmp.ne.s32.totalorder %s113, %s116
      %p125 = scmp.eq.s32.totalorder %s27, 1
      %p126 = por %p124, %p125
      %p127 = scmp.ne.s32.totalorder %s116, %s117
      %p128 = scmp.eq.s32.totalorder %s27, 0
      %p129 = por %p127, %p128
      %p130 = scmp.ne.s32.totalorder %s116, %s117
      %p131 = scmp.eq.s32.totalorder %s28, 1
      %p132 = por %p130, %p131
      %p134 = scmp.ne.s32.totalorder %s117, %s133
      %p135 = scmp.eq.s32.totalorder %s28, 0
      %p136 = por %p134, %p135
      %s137 = ssub.s32 %s29, %s48
      %s138 = ssub.s32 %s31, %s40
      %s139 = sor.u32 %s137, %s138
      %p140 = scmp.eq.s32.totalorder %s139, 0
      %s142 = sadd.s32 %s141, 1
      %s143 = scalar_select %p140, %s141, %s142
      %p146 = pneg %p140
      %p147 = scmp.eq.s32.totalorder %s22, 1
      %p148 = por %p146, %p147
      %p149 = scmp.ne.s32.totalorder %s141, %s144
      %p150 = scmp.eq.s32.totalorder %s22, 0
      %p151 = por %p149, %p150
      %p152 = scmp.ne.s32.totalorder %s141, %s144
      %p153 = scmp.eq.s32.totalorder %s27, 1
      %p154 = por %p152, %p153
      %p155 = scmp.ne.s32.totalorder %s144, %s145
      %p156 = scmp.eq.s32.totalorder %s27, 0
      %p157 = por %p155, %p156
      %p158 = scmp.ne.s32.totalorder %s144, %s145
      %p159 = scmp.eq.s32.totalorder %s28, 1
      %p160 = por %p158, %p159
      %p162 = scmp.ne.s32.totalorder %s145, %s161
      %p163 = scmp.eq.s32.totalorder %s28, 0
      %p164 = por %p162, %p163
      %s165 = ssub.s32 %s29, %s48
      %p166 = scmp.eq.s32.totalorder %s165, 0
      %s168 = sadd.s32 %s167, 1
      %s169 = scalar_select %p166, %s167, %s168
      %p172 = pneg %p166
      %p173 = scmp.eq.s32.totalorder %s22, 1
      %p174 = por %p172, %p173
      %p175 = scmp.ne.s32.totalorder %s167, %s170
      %p176 = scmp.eq.s32.totalorder %s22, 0
      %p177 = por %p175, %p176
      %p178 = scmp.ne.s32.totalorder %s167, %s170
      %p179 = scmp.eq.s32.totalorder %s27, 1
      %p180 = por %p178, %p179
      %p181 = scmp.ne.s32.totalorder %s170, %s171
      %p182 = scmp.eq.s32.totalorder %s27, 0
      %p183 = por %p181, %p182
      %p184 = scmp.ne.s32.totalorder %s170, %s171
      %p185 = scmp.eq.s32.totalorder %s28, 1
      %p186 = por %p184, %p185
      %p188 = scmp.ne.s32.totalorder %s171, %s187
      %p189 = scmp.eq.s32.totalorder %s28, 0
      %p190 = por %p188, %p189
      %s191 = ssub.s32 %s29, %s48
      %p192 = scmp.eq.s32.totalorder %s191, 0
      %s194 = sadd.s32 %s193, 1
      %s195 = scalar_select %p192, %s193, %s194
      %p198 = pneg %p192
      %p199 = scmp.eq.s32.totalorder %s22, 1
      %p200 = por %p198, %p199
      %p201 = scmp.ne.s32.totalorder %s193, %s196
      %p202 = scmp.eq.s32.totalorder %s22, 0
      %p203 = por %p201, %p202
      %p204 = scmp.ne.s32.totalorder %s193, %s196
      %p205 = scmp.eq.s32.totalorder %s27, 1
      %p206 = por %p204, %p205
      %p207 = scmp.ne.s32.totalorder %s196, %s197
      %p208 = scmp.eq.s32.totalorder %s27, 0
      %p209 = por %p207, %p208
      %p210 = scmp.ne.s32.totalorder %s196, %s197
      %p211 = scmp.eq.s32.totalorder %s28, 1
      %p212 = por %p210, %p211
      %p214 = scmp.ne.s32.totalorder %s197, %s213
      %p215 = scmp.eq.s32.totalorder %s28, 0
      %p216 = por %p214, %p215
      %s217 = ssub.s32 %s29, %s48
      %p218 = scmp.eq.s32.totalorder %s217, 0
      %s220 = sadd.s32 %s219, 1
      %s221 = scalar_select %p218, %s219, %s220
      %p224 = pneg %p218
      %p225 = scmp.eq.s32.totalorder %s22, 1
      %p226 = por %p224, %p225
      %p227 = scmp.ne.s32.totalorder %s219, %s222
      %p228 = scmp.eq.s32.totalorder %s22, 0
      %p229 = por %p227, %p228
      %p230 = scmp.ne.s32.totalorder %s219, %s222
      %p231 = scmp.eq.s32.totalorder %s27, 1
      %p232 = por %p230, %p231
      %p233 = scmp.ne.s32.totalorder %s222, %s223
      %p234 = scmp.eq.s32.totalorder %s27, 0
      %p235 = por %p233, %p234
      %p236 = scmp.ne.s32.totalorder %s222, %s223
      %p237 = scmp.eq.s32.totalorder %s28, 1
      %p238 = por %p236, %p237
      %p240 = scmp.ne.s32.totalorder %s223, %s239
      %p241 = scmp.eq.s32.totalorder %s28, 0
      %p242 = por %p240, %p241
      %p243 = scmp.le.s32.totalorder 1, %s22
      %p244 = scmp.lt.s32.totalorder %s22, 3
      %p245 = pnand %p243, %p244
      %p246 = pneg %p245
      // Predicated region
      $region9: #{tpu_custom_call.1} parent=5 // pred_check
        _
      $region10: #{tpu_custom_call.1} parent=5 // pred_check_branch
        %248 = sbr.rel (%p245) target = $region12
      $region11: #{tpu_custom_call.1} parent=5 // pred_region
        %s249 = ssub.s32 %s22, 1
      $region12: #{tpu_custom_call.1} parent=5 // pred_fallthru
        _
      %p250 = scmp.lt.s32.totalorder %s22, 2
      // Predicated region
      $region13: #{tpu_custom_call.1} parent=5 // pred_check
        %p251 = pneg %p250
      $region14: #{tpu_custom_call.1} parent=5 // pred_check_branch
        %253 = sbr.rel (%p251) target = $region16
      $region15: #{tpu_custom_call.1} parent=5 // pred_region
        // Predicated region
        $region17: #{tpu_custom_call.1} parent=15 // pred_check
          %p254 = pneg %p65
        $region18: #{tpu_custom_call.1} parent=15 // pred_check_branch
          %256 = sbr.rel (%p254) target = $region20
        $region19: #{tpu_custom_call.1} parent=15 // pred_region
          %p257 = scmp.lt.s32.totalorder %s29, 1
          %s258 = scalar_select %p257, %s29, 1
          %p259 = scmp.lt.s32.totalorder %s30, 0
          %s260 = scalar_select %p259, %s30, 0
          %p261 = scmp.lt.s32.totalorder %s31, 0
          %s262 = scalar_select %p261, %s31, 0
          %s263 = sadd.s32 %s262, %s260
          %s264 = sadd.s32 %s263, %s258
          %s265 = smul.addr %s264, 8
          %s266 = scalar_lea.vmem %s0, %s265
        $region20: #{tpu_custom_call.1} parent=15 // pred_fallthru
          _
        // Predicated region
        $region21: #{tpu_custom_call.1} parent=15 // pred_check
          %p267 = pneg %p95
        $region22: #{tpu_custom_call.1} parent=15 // pred_check_branch
          %269 = sbr.rel (%p267) target = $region24
        $region23: #{tpu_custom_call.1} parent=15 // pred_region
          %s270 = sand.u32 %s85, 1
          %s271 = scalar_lea.sflag [#allocation6], %s270
          %s272 = sand.u32 %s85, 1
          %s273 = smul.addr %s272, 8
          %s274 = scalar_lea.vmem [#allocation5], %s273
          %s276 = ssub.s32 128, 128
          %277 = vsyncadd %s271, %s276
          %s278 = sadd.s32 %s31, %s30
          %s279 = sadd.s32 %s278, %s29
          %s280 = smul.addr %s279, 128
          %s281 = scalar_lea.hbm %s1, %s280
          %s283 = sshll.u32 %s274, 4
          %s284 = int_to_ptr.vmem [resolvable:$true] %s283
          %286 = dma.hbm_to_vmem [thread:$0]  %s281, 128, %s284, %s271
        $region24: #{tpu_custom_call.1} parent=15 // pred_fallthru
          _
        // Predicated region
        $region25: #{tpu_custom_call.1} parent=15 // pred_check
          %p287 = pneg %p123
        $region26: #{tpu_custom_call.1} parent=15 // pred_check_branch
          %289 = sbr.rel (%p287) target = $region28
        $region27: #{tpu_custom_call.1} parent=15 // pred_region
          %p290 = scmp.lt.s32.totalorder %s29, 1
          %s291 = scalar_select %p290, %s29, 1
          %p292 = scmp.lt.s32.totalorder %s30, 0
          %s293 = scalar_select %p292, %s30, 0
          %s294 = sadd.s32 %s293, %s291
          %s295 = smul.addr %s294, 8
          %s296 = scalar_lea.vmem %s2, %s295
        $region28: #{tpu_custom_call.1} parent=15 // pred_fallthru
          _
        // Predicated region
        $region29: #{tpu_custom_call.1} parent=15 // pred_check
          %p297 = pneg %p151
        $region30: #{tpu_custom_call.1} parent=15 // pred_check_branch
          %299 = sbr.rel (%p297) target = $region32
        $region31: #{tpu_custom_call.1} parent=15 // pred_region
          %p300 = scmp.lt.s32.totalorder %s29, 1
          %s301 = scalar_select %p300, %s29, 1
          %p302 = scmp.lt.s32.totalorder %s31, 0
          %s303 = scalar_select %p302, %s31, 0
          %s304 = sadd.s32 %s303, %s301
          %s305 = scalar_lea.vmem %s3, %s304
        $region32: #{tpu_custom_call.1} parent=15 // pred_fallthru
          _
      $region16: #{tpu_custom_call.1} parent=5 // pred_fallthru
        _
      %p306 = scmp.le.s32.totalorder 1, %s22
      %p307 = scmp.lt.s32.totalorder %s22, 3
      %p308 = pnand %p306, %p307
      %p309 = pneg %p308
      // Predicated region
      $region33: #{tpu_custom_call.1} parent=5 // pred_check
        _
      $region34: #{tpu_custom_call.1} parent=5 // pred_check_branch
        %311 = sbr.rel (%p308) target = $region36
      $region35: #{tpu_custom_call.1} parent=5 // pred_region
        %s312 = ssub.s32 %s22, 1
        %s313 = sand.u32 %s88, 1
        %s314 = scalar_lea.sflag [#allocation6], %s313
        %s315 = sand.u32 %s88, 1
        %s316 = smul.addr %s315, 8
        %s317 = scalar_lea.vmem [#allocation5], %s316
        // Predicated region
        $region37: #{tpu_custom_call.1} parent=35 // pred_check
          %p318 = pneg %p101
        $region38: #{tpu_custom_call.1} parent=35 // pred_check_branch
          %320 = sbr.rel (%p318) target = $region40
        $region39: #{tpu_custom_call.1} parent=35 // pred_region
          %321 = dma.done %s314, 128
        $region40: #{tpu_custom_call.1} parent=35 // pred_fallthru
          _
        %p322 = scmp.lt.s32.totalorder %s32, 1
        %s323 = scalar_select %p322, %s32, 1
        %p324 = scmp.lt.s32.totalorder %s33, 0
        %s325 = scalar_select %p324, %s33, 0
        %p326 = scmp.lt.s32.totalorder %s34, 0
        %s327 = scalar_select %p326, %s34, 0
        %s328 = sadd.s32 %s327, %s325
        %s329 = sadd.s32 %s328, %s323
        %s330 = smul.addr %s329, 8
        %s331 = scalar_lea.vmem %s0, %s330
        %p332 = pneg %p71
        %p333 = pneg %p68
        %s334 = sand.u32 %s88, 1
        %s335 = scalar_lea.sflag [#allocation6], %s334
        %s336 = sand.u32 %s88, 1
        %s337 = smul.addr %s336, 8
        %s338 = scalar_lea.vmem [#allocation5], %s337
        %p339 = pneg %p101
        %p340 = pneg %p98
        %p341 = scmp.lt.s32.totalorder %s32, 1
        %s342 = scalar_select %p341, %s32, 1
        %p343 = scmp.lt.s32.totalorder %s33, 0
        %s344 = scalar_select %p343, %s33, 0
        %s345 = sadd.s32 %s344, %s342
        %s346 = smul.addr %s345, 8
        %s347 = scalar_lea.vmem %s2, %s346
        %p348 = pneg %p129
        %p349 = pneg %p126
        %p350 = scmp.lt.s32.totalorder %s32, 1
        %s351 = scalar_select %p350, %s32, 1
        %p352 = scmp.lt.s32.totalorder %s34, 0
        %s353 = scalar_select %p352, %s34, 0
        %s354 = sadd.s32 %s353, %s351
        %s355 = scalar_lea.vmem %s3, %s354
        %p356 = pneg %p157
        %p357 = pneg %p154
        %p358 = pneg %p183
        %p359 = pneg %p180
        %s360 = sand.u32 %s170, 1
        %s361 = scalar_lea.sflag [#allocation7], %s360
        %s362 = sand.u32 %s170, 1
        %s363 = smul.addr %s362, 8
        %s364 = scalar_lea.vmem [#allocation8], %s363
        %p365 = pneg %p209
        %p366 = pneg %p206
        %s367 = sand.u32 %s27, 1
        %s368 = scalar_lea.sflag [#allocation10], %s367
        %s369 = sand.u32 %s196, 1
        %s370 = smul.addr %s369, 8
        %s371 = scalar_lea.vmem [#allocation9], %s370
        %p372 = pneg %p235
        %p373 = pneg %p232
        %s374 = sand.u32 %s27, 1
        %s375 = scalar_lea.sflag [#allocation10], %s374
        %s376 = sand.u32 %s222, 1
        %s377 = smul.addr %s376, 8
        %s378 = scalar_lea.vmem [#allocation11], %s377
        %p379 = scmp.lt.s32.totalorder %s32, 1
        %s380 = scalar_select %p379, %s32, 1
        %p381 = scmp.lt.s32.totalorder %s33, 0
        %s382 = scalar_select %p381, %s33, 0
        %p383 = scmp.lt.s32.totalorder %s34, 0
        %s384 = scalar_select %p383, %s34, 0
        %s385 = sadd.s32 %s384, %s382
        %s386 = sadd.s32 %s385, %s380
        %s387 = smul.addr %s386, 8
        %s388 = scalar_lea.vmem %s0, %s387
        %p389 = scmp.lt.s32.totalorder %s32, 1
        %s390 = scalar_select %p389, %s32, 1
        %p391 = scmp.lt.s32.totalorder %s33, 0
        %s392 = scalar_select %p391, %s33, 0
        %s393 = sadd.s32 %s392, %s390
        %s394 = smul.addr %s393, 8
        %s395 = scalar_lea.vmem %s2, %s394
        %p396 = scmp.lt.s32.totalorder %s32, 1
        %s397 = scalar_select %p396, %s32, 1
        %p398 = scmp.lt.s32.totalorder %s34, 0
        %s399 = scalar_select %p398, %s34, 0
        %s400 = sadd.s32 %s399, %s397
        %s401 = scalar_lea.vmem %s3, %s400
        %p402 = scmp.eq.s32.totalorder %s33, 0
        %p403 = scmp.eq.s32.totalorder %s34, 0
        %p404 = pnand %p402, %p403
        %p405 = pneg %p404
        // Predicated region
        $region41: #{tpu_custom_call.1} parent=35 // pred_check
          _
        $region42: #{tpu_custom_call.1} parent=35 // pred_check_branch
          %407 = sbr.rel (%p404) target = $region44
        $region43: #{tpu_custom_call.1} parent=35 // pred_region
          %vm408 = vcmask 130048
          %409 = vst.msk [vmem:[#allocation2] sm:$0xff] %vm408, 0.0
          %410 = vst.msk [vmem:[#allocation3] sm:$0xff] %vm408, 0
          %411 = vst.msk [vmem:[#allocation4] sm:$0xff] %vm408, 0
        $region44: #{tpu_custom_call.1} parent=35 // pred_fallthru
          _
        %v412 = vld [vmem:[%s388] sm:$0xff]
        %v413 = vld [vmem:[%s317] sm:$0xff]
        %v414 = vld [vmem:[%s395] sm:$0xff]
        %v415 = vld [vmem:[%s401] sm:$0x1]
        %vm416 = vcmp.gt.f32.partialorder %v412, 0.0
        %vm417 = vcmp.lt.f32.partialorder %v413, 0.0
        %vm418 = vmor %vm416, %vm417
        %420 = vset.pattern.permute.xlu0 0
        %421 = vperm.xlu0 %420, %v414
        %v422 = vpop.permute.xlu0 %421
        %v425 = vlaneseq
        %v426 = vshrl.u32 %v425, 7
        %v427 = vsub.s32 0, %v426
        %v428 = vrot.slane %v415, %v427
        %v430 = vmul.f32 %v422, %v428
        %v431 = vsel %vm418, %v430, 0.0
        %v432 = vmul.f32 %v412, %v413
        %v433 = vld [vmem:[#allocation2] sm:$0xff]
        %v434 = vmul.f32 %v432, 1.442695
        %v435 = vpow.pop %v434
        %v436 = vadd.f32 %v435, 1.0
        %v437 = vlog2.pop %v436
        %v438 = vmul.f32 %v437, 0.6931472
        %v439 = vmul.f32 %v438, %v431
        %v440 = vadd.f32 %v433, %v439
        %vm441 = vcmask 130048
        %442 = vst.msk [vmem:[#allocation2] sm:$0xff] %vm441, %v440
        %vm443 = vcmp.gt.f32.partialorder %v431, 0.0
        %v444 = vld [vmem:[#allocation3] sm:$0xff]
        %vm445 = vcmp.lt.f32.partialorder %v432, 0.0
        %vm446 = vmand %vm443, %vm445
        %v447 = vsel %vm446, 1, 0
        %v448 = vadd.s32 %v444, %v447
        %449 = vst.msk [vmem:[#allocation3] sm:$0xff] %vm441, %v448
        %v450 = vld [vmem:[#allocation4] sm:$0xff]
        %v451 = vsel %vm443, 1, 0
        %v452 = vadd.s32 %v450, %v451
        %453 = vst.msk [vmem:[#allocation4] sm:$0xff] %vm441, %v452
        // Predicated region
        $region45: #{tpu_custom_call.1} parent=35 // pred_check
          _
        $region46: #{tpu_custom_call.1} parent=35 // pred_check_branch
          %455 = sbr.rel (%p404) target = $region48
        $region47: #{tpu_custom_call.1} parent=35 // pred_region
          %v456 = vld [vmem:[#allocation2] sm:$0xff]
          %v457 = vsel %vm441, %v456, 0.0
          %458 = vadd.xlane.f32.xlu0 %v457
          %v459 = vpop.xlane.xlu0 %458
          %v460 = vrot.slane %v459, 4
          %v461 = vadd.f32 %v459, %v460
          %v462 = vrot.slane %v461, 2
          %v463 = vadd.f32 %v461, %v462
          %v464 = vrot.slane %v463, 1
          %v465 = vadd.f32 %v463, %v464
          %s466 = vtos %v465
          %v467 = vstv %s466
          %v468 = vadd.f32 %v467, 0.0
          %469 = vst [vmem:[%s364] sm:$0xff] %v468
          %v470 = vld [vmem:[#allocation3] sm:$0xff]
          %v471 = vsel %vm441, %v470, 0
          %v472 = vand.u32 %v471, 65535
          %v473 = vshrl.u32 %v471, 16
          %v474 = vcvt.s32.f32 %v472
          %v475 = vcvt.s32.f32 %v473
          %476 = vadd.xlane.f32.xlu0 %v474
          %v477 = vpop.xlane.xlu0 %476
          %478 = vadd.xlane.f32.xlu0 %v475
          %v479 = vpop.xlane.xlu0 %478
          %v480 = vcvt.f32.s32 %v477
          %v481 = vcvt.f32.s32 %v479
          %v482 = vshll.u32 %v481, 16
          %v483 = vadd.s32 %v482, %v480
          %v484 = vrot.slane %v483, 4
          %v485 = vadd.s32 %v483, %v484
          %v486 = vrot.slane %v485, 2
          %v487 = vadd.s32 %v485, %v486
          %v488 = vrot.slane %v487, 1
          %v489 = vadd.s32 %v487, %v488
          %s490 = vtos %v489
          %v491 = vstv %s490
          %492 = vst [vmem:[%s371] sm:$0xff] %v491
          %v493 = vld [vmem:[#allocation4] sm:$0xff]
          %v494 = vsel %vm441, %v493, 0
          %v495 = vand.u32 %v494, 65535
          %v496 = vshrl.u32 %v494, 16
          %v497 = vcvt.s32.f32 %v495
          %v498 = vcvt.s32.f32 %v496
          %499 = vadd.xlane.f32.xlu0 %v497
          %v500 = vpop.xlane.xlu0 %499
          %501 = vadd.xlane.f32.xlu0 %v498
          %v502 = vpop.xlane.xlu0 %501
          %v503 = vcvt.f32.s32 %v500
          %v504 = vcvt.f32.s32 %v502
          %v505 = vshll.u32 %v504, 16
          %v506 = vadd.s32 %v505, %v503
          %v507 = vrot.slane %v506, 4
          %v508 = vadd.s32 %v506, %v507
          %v509 = vrot.slane %v508, 2
          %v510 = vadd.s32 %v508, %v509
          %v511 = vrot.slane %v510, 1
          %v512 = vadd.s32 %v510, %v511
          %s513 = vtos %v512
          %v514 = vstv %s513
          %515 = vst [vmem:[%s378] sm:$0xff] %v514
        $region48: #{tpu_custom_call.1} parent=35 // pred_fallthru
          _
        %s516 = sand.u32 %s170, 1
        %s517 = scalar_lea.sflag [#allocation7], %s516
        %s518 = sand.u32 %s170, 1
        %s519 = smul.addr %s518, 8
        %s520 = scalar_lea.vmem [#allocation8], %s519
        %s521 = sand.u32 %s27, 1
        %s522 = scalar_lea.sflag [#allocation10], %s521
        %s523 = sand.u32 %s196, 1
        %s524 = smul.addr %s523, 8
        %s525 = scalar_lea.vmem [#allocation9], %s524
        %s526 = sand.u32 %s27, 1
        %s527 = scalar_lea.sflag [#allocation10], %s526
        %s528 = sand.u32 %s222, 1
        %s529 = smul.addr %s528, 8
        %s530 = scalar_lea.vmem [#allocation11], %s529
        // Predicated region
        $region49: #{tpu_custom_call.1} parent=35 // pred_check
          %p531 = pneg %p180
        $region50: #{tpu_custom_call.1} parent=35 // pred_check_branch
          %533 = sbr.rel (%p531) target = $region52
        $region51: #{tpu_custom_call.1} parent=35 // pred_region
          %s535 = ssub.s32 128, 128
          %536 = vsyncadd %s517, %s535
          %s537 = smul.addr %s32, 128
          %s538 = scalar_lea.hbm %s4, %s537
          %s540 = sshll.u32 %s520, 4
          %s541 = int_to_ptr.vmem [resolvable:$true] %s540
          %543 = dma.vmem_to_hbm [thread:$0]  %s541, 128, %s538, %s517
        $region52: #{tpu_custom_call.1} parent=35 // pred_fallthru
          _
        // Predicated region
        $region53: #{tpu_custom_call.1} parent=35 // pred_check
          %p544 = pneg %p206
        $region54: #{tpu_custom_call.1} parent=35 // pred_check_branch
          %546 = sbr.rel (%p544) target = $region56
        $region55: #{tpu_custom_call.1} parent=35 // pred_region
          %s548 = ssub.s32 128, 128
          %549 = vsyncadd %s522, %s548
          %s550 = smul.addr %s32, 128
          %s551 = scalar_lea.hbm %s5, %s550
          %s553 = sshll.u32 %s525, 4
          %s554 = int_to_ptr.vmem [resolvable:$true] %s553
          %556 = dma.vmem_to_hbm [thread:$0]  %s554, 128, %s551, %s522
        $region56: #{tpu_custom_call.1} parent=35 // pred_fallthru
          _
        // Predicated region
        $region57: #{tpu_custom_call.1} parent=35 // pred_check
          %p557 = pneg %p232
        $region58: #{tpu_custom_call.1} parent=35 // pred_check_branch
          %559 = sbr.rel (%p557) target = $region60
        $region59: #{tpu_custom_call.1} parent=35 // pred_region
          %s561 = ssub.s32 128, 128
          %562 = vsyncadd %s527, %s561
          %s563 = smul.addr %s32, 128
          %s564 = scalar_lea.hbm %s6, %s563
          %s566 = sshll.u32 %s530, 4
          %s567 = int_to_ptr.vmem [resolvable:$true] %s566
          %569 = dma.vmem_to_hbm [thread:$0]  %s567, 128, %s564, %s527
        $region60: #{tpu_custom_call.1} parent=35 // pred_fallthru
          _
      $region36: #{tpu_custom_call.1} parent=5 // pred_fallthru
        _
      %p570 = scmp.le.s32.totalorder 2, %s22
      // Predicated region
      $region61: #{tpu_custom_call.1} parent=5 // pred_check
        %p571 = pneg %p570
      $region62: #{tpu_custom_call.1} parent=5 // pred_check_branch
        %573 = sbr.rel (%p571) target = $region64
      $region63: #{tpu_custom_call.1} parent=5 // pred_region
        %s574 = ssub.s32 %s22, 2
        // Predicated region
        $region65: #{tpu_custom_call.1} parent=63 // pred_check
          %p575 = pneg %p186
        $region66: #{tpu_custom_call.1} parent=63 // pred_check_branch
          %577 = sbr.rel (%p575) target = $region68
        $region67: #{tpu_custom_call.1} parent=63 // pred_region
          %s578 = sand.u32 %s171, 1
          %s579 = scalar_lea.sflag [#allocation7], %s578
          %s580 = sand.u32 %s171, 1
          %s581 = smul.addr %s580, 8
          %s582 = scalar_lea.vmem [#allocation8], %s581
          %583 = dma.done %s579, 128
        $region68: #{tpu_custom_call.1} parent=63 // pred_fallthru
          _
        // Predicated region
        $region69: #{tpu_custom_call.1} parent=63 // pred_check
          %p584 = pneg %p212
        $region70: #{tpu_custom_call.1} parent=63 // pred_check_branch
          %586 = sbr.rel (%p584) target = $region72
        $region71: #{tpu_custom_call.1} parent=63 // pred_region
          %s587 = sand.u32 %s28, 1
          %s588 = scalar_lea.sflag [#allocation10], %s587
          %s589 = sand.u32 %s197, 1
          %s590 = smul.addr %s589, 8
          %s591 = scalar_lea.vmem [#allocation9], %s590
          %592 = dma.done %s588, 128
        $region72: #{tpu_custom_call.1} parent=63 // pred_fallthru
          _
        // Predicated region
        $region73: #{tpu_custom_call.1} parent=63 // pred_check
          %p593 = pneg %p238
        $region74: #{tpu_custom_call.1} parent=63 // pred_check_branch
          %595 = sbr.rel (%p593) target = $region76
        $region75: #{tpu_custom_call.1} parent=63 // pred_region
          %s596 = sand.u32 %s28, 1
          %s597 = scalar_lea.sflag [#allocation10], %s596
          %s598 = sand.u32 %s223, 1
          %s599 = smul.addr %s598, 8
          %s600 = scalar_lea.vmem [#allocation11], %s599
          %601 = dma.done %s597, 128
        $region76: #{tpu_custom_call.1} parent=63 // pred_fallthru
          _
      $region64: #{tpu_custom_call.1} parent=5 // pred_fallthru
        _
    $region6: #{tpu_custom_call.1} parent=1 // loop_footer
      %s26 = sadd.s32 1, %s22
    $region7: #{tpu_custom_call.1} parent=1 // loop_footer_branch
      %21 = sbr.rel target = $region3
    $region8: #{tpu_custom_call.1} parent=1 // loop_exit
      _
    %602 = vsyncpa [#allocation6], 1
    %s603 = scalar_lea.sflag [#allocation6], 1
    %604 = vsyncpa %s603, 1
    %605 = vsyncpa [#allocation7], 1
    %s606 = scalar_lea.sflag [#allocation7], 1
    %607 = vsyncpa %s606, 1
    %608 = vsyncpa [#allocation10], 1
    %s609 = scalar_lea.sflag [#allocation10], 1
    %610 = vsyncpa %s609, 1

</llo_original>
